<compile_context>
chip_gen: v7x
topology: tpu7x:2x2x1
jax: 0.10.0
libtpu: 0.0.40
codegen_flags: <defaults>
</compile_context>

<pallas_src>
import jax
import jax.numpy as jnp
from jax import lax
from jax.experimental import pallas as pl
from jax.experimental.pallas import tpu as pltpu

HIDDEN = 128
_LANE = 128
_VMEM_WORKING_BUDGET = 32 * 1024 * 1024   # tile-sizing budget (v7x-safe)
_VMEM_LIMIT_BYTES = 48 * 1024 * 1024      # scoped limit; < v7x's 64 MiB / TC


def state_value_kernel(x_ref, w1_ref, b1_ref, w2_ref, b2_ref, out_ref):
    # Hidden layer: (tb, obs) @ (obs, 128) + b1 -> ReLU.  Lane-dense throughout.
    h = jnp.dot(x_ref[...], w1_ref[...], preferred_element_type=jnp.float32)
    h = jnp.maximum(h + b1_ref[...], 0.0)
    # Value head as a lane-dense (1, tb) row:
    #   v_row[0, m] = sum_k w2[0, k] * h[m, k]
    v_row = lax.dot_general(
        w2_ref[...], h,
        dimension_numbers=(((1,), (1,)), ((), ())),
        preferred_element_type=jnp.float32,
    )
    out_ref[...] = (v_row + b2_ref[0, 0]).astype(out_ref.dtype)


def _pick_tb(batch, obs, block_batch):
    """Choose the batch-tile size.

    The lane-dense (1, tb) output block requires tb % 128 == 0 unless the
    block spans the full batch, so:
      * small batches (< 256)  -> one full-batch tile (always a legal block)
      * large batches          -> 128-aligned tiles with >= 2 grid steps so
        the parallel batch axis can be split across v7x's two TensorCores.
    The tile is also capped by a VMEM working budget (x is double-buffered,
    h is (tb, 128) f32), conservative for v7x's 64 MiB VMEM per TC.
    """
    obs_pad = -(-max(obs, _LANE) // _LANE) * _LANE          # lane-padded obs
    bytes_per_row = 4 * (2 * obs_pad + 3 * HIDDEN)          # x dbuf + h temps
    vmem_rows = max(_LANE, (_VMEM_WORKING_BUDGET // bytes_per_row) // _LANE * _LANE)
    block_batch = min(block_batch, vmem_rows)

    if batch < 2 * _LANE:
        return batch                                        # single full tile
    tb = min(block_batch, batch // 2)                       # >= 2 grid steps
    return max(_LANE, (tb // _LANE) * _LANE)                # 128-aligned


def state_value_forward(x, params, *, block_batch=4096):
    """x: (batch, obs) f32.  params: w1 (obs,128), b1 (1,128), w2 (1,128), b2 (1,1)."""
    batch, obs = x.shape
    tb = _pick_tb(batch, obs, block_batch)
    grid = (pl.cdiv(batch, tb),)

    resident = lambda i: (0, 0)   # constant index_map -> stays VMEM-resident
    in_specs = [
        pl.BlockSpec((tb, obs), lambda i: (i, 0)),              # x: batch-tiled
        pl.BlockSpec((obs, HIDDEN), resident),                  # w1
        pl.BlockSpec((1, HIDDEN), resident),                    # b1
        pl.BlockSpec((1, HIDDEN), resident),                    # w2 row
        pl.BlockSpec(memory_space=pltpu.MemorySpace.SMEM),      # b2 scalar
    ]
    out_specs = pl.BlockSpec((1, tb), lambda i: (0, i))         # lane-dense row

    cost = pl.CostEstimate(
        flops=2 * batch * (obs * HIDDEN + HIDDEN),
        transcendentals=0,
        bytes_accessed=4 * (batch * obs            # x read
                            + obs * HIDDEN         # w1
                            + 2 * HIDDEN + 1       # b1, w2, b2
                            + batch),              # output write
    )

    out_row = pl.pallas_call(
        state_value_kernel,
        out_shape=jax.ShapeDtypeStruct((1, batch), jnp.float32),
        grid=grid,
        in_specs=in_specs,
        out_specs=out_specs,
        compiler_params=pltpu.CompilerParams(
            dimension_semantics=("parallel",),
            vmem_limit_bytes=_VMEM_LIMIT_BYTES,
        ),
        cost_estimate=cost,
    )(x, params["w1"], params["b1"], params["w2"], params["b2"])

    # (1, batch) -> (batch, 1): identical linear layout, free reshape.
    return out_row.reshape(batch, 1)


def init_params(key, obs_size):
    """PyTorch-Linear-style uniform(-1/sqrt(fan_in), 1/sqrt(fan_in)) init.

    w1 is stored pre-transposed as (in, out) = (obs, 128); w2 keeps PyTorch's
    native (out, in) = (1, 128) row layout (used directly by the kernel);
    biases are (1, out) rows / a (1, 1) scalar.
    """
    def uniform(k, shape, fan_in):
        bound = 1.0 / jnp.sqrt(jnp.float32(fan_in))
        return jax.random.uniform(k, shape, jnp.float32, -bound, bound)

    k1w, k1b, k2w, k2b = jax.random.split(key, 4)
    return dict(
        w1=uniform(k1w, (obs_size, HIDDEN), obs_size),
        b1=uniform(k1b, (1, HIDDEN), obs_size),
        w2=uniform(k2w, (1, HIDDEN), HIDDEN),
        b2=uniform(k2b, (1, 1), HIDDEN),
    )


def reference_forward(x, p):
    """Pure-JAX reference matching the PyTorch StateValueNetwork.forward."""
    h = jnp.maximum(x @ p["w1"] + p["b1"], 0.0)
    return h @ p["w2"].T + p["b2"]


if __name__ == "__main__":
    # TODO(synk): the Adam optimizer / training step of the PyTorch module has
    # no Pallas equivalent here; only the forward pass is implemented.
    obs_size = 32
    key = jax.random.PRNGKey(0)
    k_p, k_a, k_b, k_c = jax.random.split(key, 4)
    params = init_params(k_p, obs_size)

    # Three batch sizes exercise: two aligned 128-row tiles (256), a masked
    # remainder tile (300), and the single full-batch-tile small path (8).
    for kx, batch in ((k_a, 256), (k_b, 300), (k_c, 8)):
        x = jax.random.normal(kx, (batch, obs_size), dtype=jnp.float32)
        out = jax.block_until_ready(state_value_forward(x, params))
        ref = reference_forward(x, params)
        assert out.shape == (batch, 1)
        assert jnp.allclose(out, ref, atol=3e-5, rtol=3e-5), f"mismatch at batch={batch}"

    print("KERNEL_OK")
</pallas_src>

<mosaic_0001>
module attributes {stable_mosaic.version = 11 : i64} {
  func.func @state_value_kernel(%arg0: i32, %arg1: memref<128x32xf32, #tpu.memory_space<vmem>>, %arg2: memref<32x128xf32, #tpu.memory_space<vmem>>, %arg3: memref<1x128xf32, #tpu.memory_space<vmem>>, %arg4: memref<1x128xf32, #tpu.memory_space<vmem>>, %arg5: memref<1x1xf32, #tpu.memory_space<smem>>, %arg6: memref<1x128xf32, #tpu.memory_space<vmem>>) attributes {dimension_semantics = [#tpu.dimension_semantics<parallel>], iteration_bounds = array<i64: 2>, scalar_prefetch = 0 : i64, scratch_operands = 0 : i64, tpu.core_type = #tpu.core_type<tc>, window_params = [{transform_indices = @transform_0, window_bounds = array<i64: 128, 32>}, {pipeline_mode = #tpu.pipeline_mode<synchronous>, transform_indices = @transform_1, window_bounds = array<i64: 32, 128>}, {pipeline_mode = #tpu.pipeline_mode<synchronous>, transform_indices = @transform_2, window_bounds = array<i64: 1, 128>}, {pipeline_mode = #tpu.pipeline_mode<synchronous>, transform_indices = @transform_3, window_bounds = array<i64: 1, 128>}, {transform_indices = @transform_4, window_bounds = array<i64: 1, 1>}, {transform_indices = @transform_5, window_bounds = array<i64: 1, 128>}]} {
    %c0 = arith.constant 0 : index
    %c0_0 = arith.constant 0 : index
    %0 = vector.load %arg1[%c0, %c0_0] : memref<128x32xf32, #tpu.memory_space<vmem>>, vector<128x32xf32>
    %c0_1 = arith.constant 0 : index
    %c0_2 = arith.constant 0 : index
    %1 = vector.load %arg2[%c0_1, %c0_2] : memref<32x128xf32, #tpu.memory_space<vmem>>, vector<32x128xf32>
    %cst = arith.constant dense<0.000000e+00> : vector<128x128xf32>
    %2 = tpu.matmul %0, %1, %cst {dimension_numbers = #tpu.dot_dimension_numbers<[1], [0], [0], [1], [0, 0, 1, 1], [], []>} : vector<128x32xf32>, vector<32x128xf32>, vector<128x128xf32> -> vector<128x128xf32>
    %c0_3 = arith.constant 0 : index
    %c0_4 = arith.constant 0 : index
    %3 = vector.load %arg3[%c0_3, %c0_4] : memref<1x128xf32, #tpu.memory_space<vmem>>, vector<1x128xf32>
    %4 = vector.broadcast %3 : vector<1x128xf32> to vector<128x128xf32>
    %5 = arith.addf %2, %4 : vector<128x128xf32>
    %cst_5 = arith.constant 0.000000e+00 : f32
    %6 = vector.broadcast %cst_5 : f32 to vector<128x128xf32>
    %7 = arith.maximumf %5, %6 : vector<128x128xf32>
    %c0_6 = arith.constant 0 : index
    %c0_7 = arith.constant 0 : index
    %8 = vector.load %arg4[%c0_6, %c0_7] : memref<1x128xf32, #tpu.memory_space<vmem>>, vector<1x128xf32>
    %cst_8 = arith.constant dense<0.000000e+00> : vector<1x128xf32>
    %9 = tpu.matmul %8, %7, %cst_8 {dimension_numbers = #tpu.dot_dimension_numbers<[1], [1], [0], [0], [0, 0, 1, 0], [], []>} : vector<1x128xf32>, vector<128x128xf32>, vector<1x128xf32> -> vector<1x128xf32>
    %c0_9 = arith.constant 0 : index
    %c0_10 = arith.constant 0 : index
    %10 = memref.load %arg5[%c0_9, %c0_10] : memref<1x1xf32, #tpu.memory_space<smem>>
    %11 = vector.broadcast %10 : f32 to vector<1x128xf32>
    %12 = arith.addf %9, %11 : vector<1x128xf32>
    %c0_11 = arith.constant 0 : index
    %c0_12 = arith.constant 0 : index
    %13 = vector.load %arg6[%c0_11, %c0_12] : memref<1x128xf32, #tpu.memory_space<vmem>>, vector<1x128xf32>
    tpu.vector_store %arg6[%c0_11, %c0_12], %12 {strides = array<i32>} : memref<1x128xf32, #tpu.memory_space<vmem>>, vector<1x128xf32>,
    return
  }
  func.func @transform_0(%arg0: i32) -> (i32, i32) {
    %c0_i32 = arith.constant 0 : i32
    %c0_i32_0 = arith.constant 0 : i32
    return %arg0, %c0_i32 : i32, i32
  }
  func.func @transform_1(%arg0: i32) -> (i32, i32) {
    %c0_i32 = arith.constant 0 : i32
    %c0_i32_0 = arith.constant 0 : i32
    %c0_i32_1 = arith.constant 0 : i32
    return %c0_i32, %c0_i32_0 : i32, i32
  }
  func.func @transform_2(%arg0: i32) -> (i32, i32) {
    %c0_i32 = arith.constant 0 : i32
    %c0_i32_0 = arith.constant 0 : i32
    %c0_i32_1 = arith.constant 0 : i32
    return %c0_i32, %c0_i32_0 : i32, i32
  }
  func.func @transform_3(%arg0: i32) -> (i32, i32) {
    %c0_i32 = arith.constant 0 : i32
    %c0_i32_0 = arith.constant 0 : i32
    %c0_i32_1 = arith.constant 0 : i32
    return %c0_i32, %c0_i32_0 : i32, i32
  }
  func.func @transform_4(%arg0: i32) -> (i32, i32) {
    %c0_i32 = arith.constant 0 : i32
    %c0_i32_0 = arith.constant 0 : i32
    %c0_i32_1 = arith.constant 0 : i32
    return %c0_i32, %c0_i32_0 : i32, i32
  }
  func.func @transform_5(%arg0: i32) -> (i32, i32) {
    %c0_i32 = arith.constant 0 : i32
    %c0_i32_0 = arith.constant 0 : i32
    return %c0_i32, %arg0 : i32, i32
  }
}

</mosaic_0001>

<llo_original>
// kernel: tpu_custom_call.1
$region0: #{tpu_custom_call.1}
  #allocation0 [shape = 'u32[]', space=smem, size = 0x4, offset = 0x4, fixed_abs, tag = 'smem constant byte address 0x4 - core index']
  #allocation1 [shape = 'u32[144,128]{1,0:T(1,128)}', space=vmem, size = 0x12000, scoped, tag = 'internal scratch']
  #allocation2 [shape = 'f32[1,1]{1,0:T(1,128)S(6)}', space=smem, size = 0x200, scoped, tag = 'scoped memory for tpu_custom_call.1']
  %s0 = inlined_call_operand.vmem [shape: f32[256,32], index: 0, kind: input, shape index: {}]
  %s1 = inlined_call_operand.vmem [shape: f32[32,128], index: 1, kind: input, shape index: {}]
  %s2 = inlined_call_operand.vmem [shape: f32[1,128], index: 2, kind: input, shape index: {}]
  %s3 = inlined_call_operand.vmem [shape: f32[1,128], index: 3, kind: input, shape index: {}]
  %s4 = inlined_call_operand.<no memory space> [shape: f32[1,1], index: 4, kind: input, shape index: {}]
  %s5 = inlined_call_operand.hbm [shape: f32[1,256], index: 5, kind: output, shape index: {}]
  %s6 = sld [smem:[#allocation0]]
  $region53: #{tpu_custom_call.1} parent=0
    _
  %s8 = ssub.s32 1, %s6
  %s9 = scalar_select 0, %s8, %s6
  %10 = sst [smem:[#allocation2]] %s4
  $region1: #{tpu_custom_call.1} parent=0
    #allocation3 [shape = 'u8[1024]{0}', space=vmem, size = 0x400, scoped, tag = 'output window, operand 0']
    #allocation4 [shape = 's32[2]{0}', space=sflag, size = 0x8, scoped, tag = 'scoped memory for tpu_custom_call.1']
    %11 = vsyncpa [#allocation4], 0
    %s12 = scalar_lea.sflag [#allocation4], 1
    %13 = vsyncpa %s12, 0
    loop: start=0, step=1, limit=4
    $region2: #{tpu_custom_call.1} parent=1 // loop_pre_header
      _
    $region3: #{tpu_custom_call.1} parent=1 // loop_header
      %s15 = sphi 0, %s19
      %p16 = scmp.ge.s32.totalorder %s15, 4
      %s25 = sphi 0, %s27
      %s28 = sphi 0, %s25
      %s29 = sphi 0, %s28
      %s45 = sphi 0, %s29
      %s49 = sphi 0, %s49
      %s51 = sphi 0, %s49
      %s52 = sphi 0, %s51
      %s66 = sphi 0, %s52
      %s70 = sphi 0, %s70
      %s72 = sphi 0, %s70
      %s73 = sphi 0, %s72
      %s87 = sphi 0, %s73
      %s91 = sphi 0, %s91
      %s93 = sphi 0, %s91
      %s94 = sphi 0, %s93
      %s108 = sphi 0, %s94
      %s112 = sphi 0, %s112
      %s114 = sphi 0, %s112
      %s115 = sphi 0, %s114
      %s129 = sphi 0, %s115
      %s135 = sphi 0, %s137
      %s138 = sphi 0, %s135
      %s139 = sphi 0, %s138
      %s155 = sphi 0, %s139
    $region4: #{tpu_custom_call.1} parent=1 // loop_header_branch
      %18 = sbr.rel (%p16) target = $region8
    $region5: #{tpu_custom_call.1} parent=1 // loop_body
      %s20 = ssub.s32 %s15, 1
      %s21 = ssub.s32 %s15, 2
      %s22 = sadd.s32 %s15, 1
      %s23 = ssub.s32 %s15, %s22
      %p24 = scmp.eq.s32.totalorder %s23, 0
      %s26 = sadd.s32 %s25, 1
      %s27 = scalar_select %p24, %s25, %s26
      %p30 = pneg %p24
      %p31 = scmp.eq.s32.totalorder %s15, 1
      %p32 = por %p30, %p31
      %p33 = scmp.ne.s32.totalorder %s25, %s28
      %p34 = scmp.eq.s32.totalorder %s15, 0
      %p35 = por %p33, %p34
      %p36 = scmp.ne.s32.totalorder %s25, %s28
      %p37 = scmp.eq.s32.totalorder %s20, 1
      %p38 = por %p36, %p37
      %p39 = scmp.ne.s32.totalorder %s28, %s29
      %p40 = scmp.eq.s32.totalorder %s20, 0
      %p41 = por %p39, %p40
      %p42 = scmp.ne.s32.totalorder %s28, %s29
      %p43 = scmp.eq.s32.totalorder %s21, 1
      %p44 = por %p42, %p43
      %p46 = scmp.ne.s32.totalorder %s29, %s45
      %p47 = scmp.eq.s32.totalorder %s21, 0
      %p48 = por %p46, %p47
      %s50 = sadd.s32 %s49, 1
      %p53 = scmp.eq.s32.totalorder %s15, 1
      %p54 = scmp.ne.s32.totalorder %s49, %s51
      %p55 = scmp.eq.s32.totalorder %s15, 0
      %p56 = por %p54, %p55
      %p57 = scmp.ne.s32.totalorder %s49, %s51
      %p58 = scmp.eq.s32.totalorder %s20, 1
      %p59 = por %p57, %p58
      %p60 = scmp.ne.s32.totalorder %s51, %s52
      %p61 = scmp.eq.s32.totalorder %s20, 0
      %p62 = por %p60, %p61
      %p63 = scmp.ne.s32.totalorder %s51, %s52
      %p64 = scmp.eq.s32.totalorder %s21, 1
      %p65 = por %p63, %p64
      %p67 = scmp.ne.s32.totalorder %s52, %s66
      %p68 = scmp.eq.s32.totalorder %s21, 0
      %p69 = por %p67, %p68
      %s71 = sadd.s32 %s70, 1
      %p74 = scmp.eq.s32.totalorder %s15, 1
      %p75 = scmp.ne.s32.totalorder %s70, %s72
      %p76 = scmp.eq.s32.totalorder %s15, 0
      %p77 = por %p75, %p76
      %p78 = scmp.ne.s32.totalorder %s70, %s72
      %p79 = scmp.eq.s32.totalorder %s20, 1
      %p80 = por %p78, %p79
      %p81 = scmp.ne.s32.totalorder %s72, %s73
      %p82 = scmp.eq.s32.totalorder %s20, 0
      %p83 = por %p81, %p82
      %p84 = scmp.ne.s32.totalorder %s72, %s73
      %p85 = scmp.eq.s32.totalorder %s21, 1
      %p86 = por %p84, %p85
      %p88 = scmp.ne.s32.totalorder %s73, %s87
      %p89 = scmp.eq.s32.totalorder %s21, 0
      %p90 = por %p88, %p89
      %s92 = sadd.s32 %s91, 1
      %p95 = scmp.eq.s32.totalorder %s15, 1
      %p96 = scmp.ne.s32.totalorder %s91, %s93
      %p97 = scmp.eq.s32.totalorder %s15, 0
      %p98 = por %p96, %p97
      %p99 = scmp.ne.s32.totalorder %s91, %s93
      %p100 = scmp.eq.s32.totalorder %s20, 1
      %p101 = por %p99, %p100
      %p102 = scmp.ne.s32.totalorder %s93, %s94
      %p103 = scmp.eq.s32.totalorder %s20, 0
      %p104 = por %p102, %p103
      %p105 = scmp.ne.s32.totalorder %s93, %s94
      %p106 = scmp.eq.s32.totalorder %s21, 1
      %p107 = por %p105, %p106
      %p109 = scmp.ne.s32.totalorder %s94, %s108
      %p110 = scmp.eq.s32.totalorder %s21, 0
      %p111 = por %p109, %p110
      %s113 = sadd.s32 %s112, 1
      %p116 = scmp.eq.s32.totalorder %s15, 1
      %p117 = scmp.ne.s32.totalorder %s112, %s114
      %p118 = scmp.eq.s32.totalorder %s15, 0
      %p119 = por %p117, %p118
      %p120 = scmp.ne.s32.totalorder %s112, %s114
      %p121 = scmp.eq.s32.totalorder %s20, 1
      %p122 = por %p120, %p121
      %p123 = scmp.ne.s32.totalorder %s114, %s115
      %p124 = scmp.eq.s32.totalorder %s20, 0
      %p125 = por %p123, %p124
      %p126 = scmp.ne.s32.totalorder %s114, %s115
      %p127 = scmp.eq.s32.totalorder %s21, 1
      %p128 = por %p126, %p127
      %p130 = scmp.ne.s32.totalorder %s115, %s129
      %p131 = scmp.eq.s32.totalorder %s21, 0
      %p132 = por %p130, %p131
      %s133 = ssub.s32 %s15, %s22
      %p134 = scmp.eq.s32.totalorder %s133, 0
      %s136 = sadd.s32 %s135, 1
      %s137 = scalar_select %p134, %s135, %s136
      %p140 = pneg %p134
      %p141 = scmp.eq.s32.totalorder %s15, 1
      %p142 = por %p140, %p141
      %p143 = scmp.ne.s32.totalorder %s135, %s138
      %p144 = scmp.eq.s32.totalorder %s15, 0
      %p145 = por %p143, %p144
      %p146 = scmp.ne.s32.totalorder %s135, %s138
      %p147 = scmp.eq.s32.totalorder %s20, 1
      %p148 = por %p146, %p147
      %p149 = scmp.ne.s32.totalorder %s138, %s139
      %p150 = scmp.eq.s32.totalorder %s20, 0
      %p151 = por %p149, %p150
      %p152 = scmp.ne.s32.totalorder %s138, %s139
      %p153 = scmp.eq.s32.totalorder %s21, 1
      %p154 = por %p152, %p153
      %p156 = scmp.ne.s32.totalorder %s139, %s155
      %p157 = scmp.eq.s32.totalorder %s21, 0
      %p158 = por %p156, %p157
      %p159 = scmp.le.s32.totalorder 1, %s15
      %p160 = scmp.lt.s32.totalorder %s15, 3
      %p161 = pnand %p159, %p160
      %p162 = pneg %p161
      // Predicated region
      $region9: #{tpu_custom_call.1} parent=5 // pred_check
        _
      $region10: #{tpu_custom_call.1} parent=5 // pred_check_branch
        %164 = sbr.rel (%p161) target = $region12
      $region11: #{tpu_custom_call.1} parent=5 // pred_region
        %s165 = ssub.s32 %s15, 1
        // Predicated region
        $region13: #{tpu_custom_call.1} parent=11 // pred_check
          %p166 = pneg %p62
        $region14: #{tpu_custom_call.1} parent=11 // pred_check_branch
          %168 = sbr.rel (%p166) target = $region16
        $region15: #{tpu_custom_call.1} parent=11 // pred_region
          _
        $region16: #{tpu_custom_call.1} parent=11 // pred_fallthru
          _
        // Predicated region
        $region17: #{tpu_custom_call.1} parent=11 // pred_check
          %p169 = pneg %p83
        $region18: #{tpu_custom_call.1} parent=11 // pred_check_branch
          %171 = sbr.rel (%p169) target = $region20
        $region19: #{tpu_custom_call.1} parent=11 // pred_region
          _
        $region20: #{tpu_custom_call.1} parent=11 // pred_fallthru
          _
        // Predicated region
        $region21: #{tpu_custom_call.1} parent=11 // pred_check
          %p172 = pneg %p104
        $region22: #{tpu_custom_call.1} parent=11 // pred_check_branch
          %174 = sbr.rel (%p172) target = $region24
        $region23: #{tpu_custom_call.1} parent=11 // pred_region
          _
        $region24: #{tpu_custom_call.1} parent=11 // pred_fallthru
          _
        // Predicated region
        $region25: #{tpu_custom_call.1} parent=11 // pred_check
          %p175 = pneg %p125
        $region26: #{tpu_custom_call.1} parent=11 // pred_check_branch
          %177 = sbr.rel (%p175) target = $region28
        $region27: #{tpu_custom_call.1} parent=11 // pred_region
          _
        $region28: #{tpu_custom_call.1} parent=11 // pred_fallthru
          _
      $region12: #{tpu_custom_call.1} parent=5 // pred_fallthru
        _
      %p178 = scmp.lt.s32.totalorder %s15, 2
      // Predicated region
      $region29: #{tpu_custom_call.1} parent=5 // pred_check
        %p179 = pneg %p178
      $region30: #{tpu_custom_call.1} parent=5 // pred_check_branch
        %181 = sbr.rel (%p179) target = $region32
      $region31: #{tpu_custom_call.1} parent=5 // pred_region
        // Predicated region
        $region33: #{tpu_custom_call.1} parent=31 // pred_check
          %p182 = pneg %p35
        $region34: #{tpu_custom_call.1} parent=31 // pred_check_branch
          %184 = sbr.rel (%p182) target = $region36
        $region35: #{tpu_custom_call.1} parent=31 // pred_region
          %s185 = smul.u32 16, %s15
          %p186 = scmp.lt.s32.totalorder %s185, 31
          %s187 = scalar_select %p186, %s185, 31
          %s188 = smul.addr %s187, 8
          %s189 = scalar_lea.vmem %s0, %s188
          %s190 = smul.u32 16, %s15
        $region36: #{tpu_custom_call.1} parent=31 // pred_fallthru
          _
      $region32: #{tpu_custom_call.1} parent=5 // pred_fallthru
        _
      %p191 = scmp.le.s32.totalorder 1, %s15
      %p192 = scmp.lt.s32.totalorder %s15, 3
      %p193 = pnand %p191, %p192
      %p194 = pneg %p193
      // Predicated region
      $region37: #{tpu_custom_call.1} parent=5 // pred_check
        _
      $region38: #{tpu_custom_call.1} parent=5 // pred_check_branch
        %196 = sbr.rel (%p193) target = $region40
      $region39: #{tpu_custom_call.1} parent=5 // pred_region
        %s197 = ssub.s32 %s15, 1
        %s198 = smul.u32 16, %s20
        %p199 = scmp.lt.s32.totalorder %s198, 31
        %s200 = scalar_select %p199, %s198, 31
        %s201 = smul.addr %s200, 8
        %s202 = scalar_lea.vmem %s0, %s201
        %p203 = pneg %p41
        %p204 = pneg %p38
        %p205 = pneg %p62
        %p206 = pneg %p59
        %p207 = pneg %p83
        %p208 = pneg %p80
        %p209 = pneg %p104
        %p210 = pneg %p101
        %p211 = pneg %p125
        %p212 = pneg %p122
        %p213 = pneg %p151
        %p214 = pneg %p148
        %s215 = sand.u32 %s138, 1
        %s216 = scalar_lea.sflag [#allocation4], %s215
        %s217 = sand.u32 %s138, 1
        %s218 = scalar_lea.vmem [#allocation3], %s217
        %s219 = smul.u32 16, %s20
        %p220 = scmp.lt.s32.totalorder %s219, 31
        %s221 = scalar_select %p220, %s219, 31
        %s222 = smul.addr %s221, 8
        %s223 = scalar_lea.vmem %s0, %s222
        %s224 = smul.u32 16, %s20
        %v225 = vld [vmem:[%s223] sm:$0xff]
        %v226 = vld [vmem:[%s223 + $0x8] sm:$0xff]
        %v227 = vld [vmem:[%s223 + $0x10] sm:$0xff]
        %v228 = vld [vmem:[%s223 + $0x18] sm:$0xff]
        %v229 = vld [vmem:[%s223 + $0x20] sm:$0xff]
        %v230 = vld [vmem:[%s223 + $0x28] sm:$0xff]
        %v231 = vld [vmem:[%s223 + $0x30] sm:$0xff]
        %v232 = vld [vmem:[%s223 + $0x38] sm:$0xff]
        %v233 = vld [vmem:[%s223 + $0x40] sm:$0xff]
        %v234 = vld [vmem:[%s223 + $0x48] sm:$0xff]
        %v235 = vld [vmem:[%s223 + $0x50] sm:$0xff]
        %v236 = vld [vmem:[%s223 + $0x58] sm:$0xff]
        %v237 = vld [vmem:[%s223 + $0x60] sm:$0xff]
        %v238 = vld [vmem:[%s223 + $0x68] sm:$0xff]
        %v239 = vld [vmem:[%s223 + $0x70] sm:$0xff]
        %v240 = vld [vmem:[%s223 + $0x78] sm:$0xff]
        %v241 = vld [vmem:[%s1] sm:$0xff]
        %v242 = vld [vmem:[%s1 + $0x8] sm:$0xff]
        %v243 = vld [vmem:[%s1 + $0x10] sm:$0xff]
        %v244 = vld [vmem:[%s1 + $0x18] sm:$0xff]
        %v245 = vld [vmem:[%s2] sm:$0x1]
        %v247 = vlaneseq
        %v248 = vshrl.u32 %v247, 7
        %v249 = vsub.s32 0, %v248
        %v250 = vrot.slane %v245, %v249
        %vm252 = vcmask 261120
        %v254 = vsel %vm252, %v225, 0
        %v257 = vsel %vm252, %v226, 0
        %v260 = vsel %vm252, %v227, 0
        %v263 = vsel %vm252, %v228, 0
        %v266 = vsel %vm252, %v229, 0
        %v269 = vsel %vm252, %v230, 0
        %v272 = vsel %vm252, %v231, 0
        %v275 = vsel %vm252, %v232, 0
        %v278 = vsel %vm252, %v233, 0
        %v281 = vsel %vm252, %v234, 0
        %v284 = vsel %vm252, %v235, 0
        %v287 = vsel %vm252, %v236, 0
        %v290 = vsel %vm252, %v237, 0
        %v293 = vsel %vm252, %v238, 0
        %v296 = vsel %vm252, %v239, 0
        %v299 = vsel %vm252, %v240, 0
        %301 = vmatprep.subr.mxu0 0.0
        %302 = vmatpush1.msra.mxu0 %v241
        %303 = vmatprep.subr.mxu0 0.0
        %304 = vmatpush1.msra.mxu0 %v242
        %305 = vmatprep.subr.mxu0 0.0
        %306 = vmatpush1.msra.mxu0 %v243
        %307 = vmatprep.subr.mxu0 0.0
        %308 = vmatpush1.msra.mxu0 %v244
        %309 = vmatprep.subr.mxu0 0.0
        %310 = vmatpush1.msra.mxu0 0.0
        %311 = vmatprep.subr.mxu0 0.0
        %312 = vmatpush1.msra.mxu0 0.0
        %313 = vmatprep.subr.mxu0 0.0
        %314 = vmatpush1.msra.mxu0 0.0
        %315 = vmatprep.subr.mxu0 0.0
        %316 = vmatpush1.msra.mxu0 0.0
        %317 = vmatprep.subr.mxu0 0.0
        %318 = vmatpush1.msra.mxu0 0.0
        %319 = vmatprep.subr.mxu0 0.0
        %320 = vmatpush1.msra.mxu0 0.0
        %321 = vmatprep.subr.mxu0 0.0
        %322 = vmatpush1.msra.mxu0 0.0
        %323 = vmatprep.subr.mxu0 0.0
        %324 = vmatpush1.msra.mxu0 0.0
        %325 = vmatprep.subr.mxu0 0.0
        %326 = vmatpush1.msra.mxu0 0.0
        %327 = vmatprep.subr.mxu0 0.0
        %328 = vmatpush1.msra.mxu0 0.0
        %329 = vmatprep.subr.mxu0 0.0
        %330 = vmatpush1.msra.mxu0 0.0
        %331 = vmatprep.subr.mxu0 0.0
        %332 = vmatpush1.msra.mxu0 0.0
        %333 = vmatprep.subr.mxu0 0.0
        %334 = vmatpush1.msra.mxu0 0.0
        %335 = vmatprep.subr.mxu0 0.0
        %336 = vmatpush1.msra.mxu0 0.0
        %337 = vmatprep.subr.mxu0 0.0
        %338 = vmatpush1.msra.mxu0 0.0
        %339 = vmatprep.subr.mxu0 0.0
        %340 = vmatpush1.msra.mxu0 0.0
        %341 = vmatprep.subr.mxu0 0.0
        %342 = vmatpush1.msra.mxu0 0.0
        %343 = vmatprep.subr.mxu0 0.0
        %344 = vmatpush1.msra.mxu0 0.0
        %345 = vmatprep.subr.mxu0 0.0
        %346 = vmatpush1.msra.mxu0 0.0
        %347 = vmatprep.subr.mxu0 0.0
        %348 = vmatpush1.msra.mxu0 0.0
        %349 = vmatprep.subr.mxu0 0.0
        %350 = vmatpush1.msra.mxu0 0.0
        %351 = vmatprep.subr.mxu0 0.0
        %352 = vmatpush1.msra.mxu0 0.0
        %353 = vmatprep.subr.mxu0 0.0
        %354 = vmatpush1.msra.mxu0 0.0
        %355 = vmatprep.subr.mxu0 0.0
        %356 = vmatpush1.msra.mxu0 0.0
        %357 = vmatprep.subr.mxu0 0.0
        %358 = vmatpush1.msra.mxu0 0.0
        %359 = vmatprep.subr.mxu0 0.0
        %360 = vmatpush1.msra.mxu0 0.0
        %361 = vmatprep.subr.mxu0 0.0
        %362 = vmatpush1.msra.mxu0 0.0
        %363 = vmatprep.subr.mxu0 0.0
        %364 = vmatpush1.msra.mxu0 0.0
        %365 = vmatprep.mubr.f32.mxu0 0.0
        %366 = vmatmul.mubr.f32.gmra.mrb[0].mxu0 %v254
        %v367 = vpop.f32.mrb[0].mxu0
        %v368 = vadd.f32 %v250, %v367
        %v369 = vpop.f32.mrb[0].mxu0
        %370 = vmatprep.mubr.f32.mxu0 0.0
        %371 = vmatmul.mubr.f32.gmra.mrb[0].mxu0 %v257
        %v372 = vpop.f32.mrb[0].mxu0
        %v373 = vadd.f32 %v250, %v372
        %v374 = vpop.f32.mrb[0].mxu0
        %375 = vmatprep.mubr.f32.mxu0 0.0
        %376 = vmatmul.mubr.f32.gmra.mrb[0].mxu0 %v260
        %v377 = vpop.f32.mrb[0].mxu0
        %v378 = vadd.f32 %v250, %v377
        %v379 = vpop.f32.mrb[0].mxu0
        %380 = vmatprep.mubr.f32.mxu0 0.0
        %381 = vmatmul.mubr.f32.gmra.mrb[0].mxu0 %v263
        %v382 = vpop.f32.mrb[0].mxu0
        %v383 = vadd.f32 %v250, %v382
        %v384 = vpop.f32.mrb[0].mxu0
        %385 = vmatprep.mubr.f32.mxu0 0.0
        %386 = vmatmul.mubr.f32.gmra.mrb[0].mxu0 %v266
        %v387 = vpop.f32.mrb[0].mxu0
        %v388 = vadd.f32 %v250, %v387
        %v389 = vpop.f32.mrb[0].mxu0
        %390 = vmatprep.mubr.f32.mxu0 0.0
        %391 = vmatmul.mubr.f32.gmra.mrb[0].mxu0 %v269
        %v392 = vpop.f32.mrb[0].mxu0
        %v393 = vadd.f32 %v250, %v392
        %v394 = vpop.f32.mrb[0].mxu0
        %395 = vmatprep.mubr.f32.mxu0 0.0
        %396 = vmatmul.mubr.f32.gmra.mrb[0].mxu0 %v272
        %v397 = vpop.f32.mrb[0].mxu0
        %v398 = vadd.f32 %v250, %v397
        %v399 = vpop.f32.mrb[0].mxu0
        %400 = vmatprep.mubr.f32.mxu0 0.0
        %401 = vmatmul.mubr.f32.gmra.mrb[0].mxu0 %v275
        %v402 = vpop.f32.mrb[0].mxu0
        %v403 = vadd.f32 %v250, %v402
        %v404 = vpop.f32.mrb[0].mxu0
        %405 = vmatprep.mubr.f32.mxu0 0.0
        %406 = vmatmul.mubr.f32.gmra.mrb[0].mxu0 %v278
        %v407 = vpop.f32.mrb[0].mxu0
        %v408 = vadd.f32 %v250, %v407
        %v409 = vpop.f32.mrb[0].mxu0
        %410 = vmatprep.mubr.f32.mxu0 0.0
        %411 = vmatmul.mubr.f32.gmra.mrb[0].mxu0 %v281
        %v412 = vpop.f32.mrb[0].mxu0
        %v413 = vadd.f32 %v250, %v412
        %v414 = vpop.f32.mrb[0].mxu0
        %415 = vmatprep.mubr.f32.mxu0 0.0
        %416 = vmatmul.mubr.f32.gmra.mrb[0].mxu0 %v284
        %v417 = vpop.f32.mrb[0].mxu0
        %v418 = vadd.f32 %v250, %v417
        %v419 = vpop.f32.mrb[0].mxu0
        %420 = vmatprep.mubr.f32.mxu0 0.0
        %421 = vmatmul.mubr.f32.gmra.mrb[0].mxu0 %v287
        %v422 = vpop.f32.mrb[0].mxu0
        %v423 = vadd.f32 %v250, %v422
        %v424 = vpop.f32.mrb[0].mxu0
        %425 = vmatprep.mubr.f32.mxu0 0.0
        %426 = vmatmul.mubr.f32.gmra.mrb[0].mxu0 %v290
        %v427 = vpop.f32.mrb[0].mxu0
        %v428 = vadd.f32 %v250, %v427
        %v429 = vpop.f32.mrb[0].mxu0
        %430 = vmatprep.mubr.f32.mxu0 0.0
        %431 = vmatmul.mubr.f32.gmra.mrb[0].mxu0 %v293
        %v432 = vpop.f32.mrb[0].mxu0
        %v433 = vadd.f32 %v250, %v432
        %v434 = vpop.f32.mrb[0].mxu0
        %435 = vmatprep.mubr.f32.mxu0 0.0
        %436 = vmatmul.mubr.f32.gmra.mrb[0].mxu0 %v296
        %v437 = vpop.f32.mrb[0].mxu0
        %v438 = vadd.f32 %v250, %v437
        %v439 = vpop.f32.mrb[0].mxu0
        %440 = vmatprep.mubr.f32.mxu0 0.0
        %441 = vmatmul.mubr.f32.gmra.mrb[0].mxu0 %v299
        %v442 = vpop.f32.mrb[0].mxu0
        %v443 = vadd.f32 %v250, %v442
        %v444 = vpop.f32.mrb[0].mxu0
        %445 = vdwg.mxu0
        %v446 = vmax.f32 %v368, 0.0
        %v447 = vmax.f32 %v373, 0.0
        %v448 = vmax.f32 %v378, 0.0
        %v449 = vmax.f32 %v383, 0.0
        %v450 = vmax.f32 %v388, 0.0
        %v451 = vmax.f32 %v393, 0.0
        %v452 = vmax.f32 %v398, 0.0
        %v453 = vmax.f32 %v403, 0.0
        %v454 = vmax.f32 %v408, 0.0
        %v455 = vmax.f32 %v413, 0.0
        %v456 = vmax.f32 %v418, 0.0
        %v457 = vmax.f32 %v423, 0.0
        %v458 = vmax.f32 %v428, 0.0
        %v459 = vmax.f32 %v433, 0.0
        %v460 = vmax.f32 %v438, 0.0
        %v461 = vmax.f32 %v443, 0.0
        %v462 = vld [vmem:[%s3] sm:$0x1]
        %s463 = sld [smem:[#allocation2]]
        %v464 = vstv %s463
        %465 = vmatprep.subr.mxu0 0.0
        %466 = vmatpush1.xpose.msra.mxu0 %v446
        %467 = vmatprep.subr.mxu0 0.0
        %468 = vmatpush1.xpose.msra.mxu0 %v447
        %469 = vmatprep.subr.mxu0 0.0
        %470 = vmatpush1.xpose.msra.mxu0 %v448
        %471 = vmatprep.subr.mxu0 0.0
        %472 = vmatpush1.xpose.msra.mxu0 %v449
        %473 = vmatprep.subr.mxu0 0.0
        %474 = vmatpush1.xpose.msra.mxu0 %v450
        %475 = vmatprep.subr.mxu0 0.0
        %476 = vmatpush1.xpose.msra.mxu0 %v451
        %477 = vmatprep.subr.mxu0 0.0
        %478 = vmatpush1.xpose.msra.mxu0 %v452
        %479 = vmatprep.subr.mxu0 0.0
        %480 = vmatpush1.xpose.msra.mxu0 %v453
        %481 = vmatprep.subr.mxu0 0.0
        %482 = vmatpush1.xpose.msra.mxu0 %v454
        %483 = vmatprep.subr.mxu0 0.0
        %484 = vmatpush1.xpose.msra.mxu0 %v455
        %485 = vmatprep.subr.mxu0 0.0
        %486 = vmatpush1.xpose.msra.mxu0 %v456
        %487 = vmatprep.subr.mxu0 0.0
        %488 = vmatpush1.xpose.msra.mxu0 %v457
        %489 = vmatprep.subr.mxu0 0.0
        %490 = vmatpush1.xpose.msra.mxu0 %v458
        %491 = vmatprep.subr.mxu0 0.0
        %492 = vmatpush1.xpose.msra.mxu0 %v459
        %493 = vmatprep.subr.mxu0 0.0
        %494 = vmatpush1.xpose.msra.mxu0 %v460
        %495 = vmatprep.subr.mxu0 0.0
        %496 = vmatpush1.xpose.msra.mxu0 %v461
        %497 = vmatprep.subr.mxu0 0.0
        %498 = vmatpush1.xpose.msra.mxu0 0.0
        %499 = vmatprep.subr.mxu0 0.0
        %500 = vmatpush1.xpose.msra.mxu0 0.0
        %501 = vmatprep.subr.mxu0 0.0
        %502 = vmatpush1.xpose.msra.mxu0 0.0
        %503 = vmatprep.subr.mxu0 0.0
        %504 = vmatpush1.xpose.msra.mxu0 0.0
        %505 = vmatprep.subr.mxu0 0.0
        %506 = vmatpush1.xpose.msra.mxu0 0.0
        %507 = vmatprep.subr.mxu0 0.0
        %508 = vmatpush1.xpose.msra.mxu0 0.0
        %509 = vmatprep.subr.mxu0 0.0
        %510 = vmatpush1.xpose.msra.mxu0 0.0
        %511 = vmatprep.subr.mxu0 0.0
        %512 = vmatpush1.xpose.msra.mxu0 0.0
        %513 = vmatprep.subr.mxu0 0.0
        %514 = vmatpush1.xpose.msra.mxu0 0.0
        %515 = vmatprep.subr.mxu0 0.0
        %516 = vmatpush1.xpose.msra.mxu0 0.0
        %517 = vmatprep.subr.mxu0 0.0
        %518 = vmatpush1.xpose.msra.mxu0 0.0
        %519 = vmatprep.subr.mxu0 0.0
        %520 = vmatpush1.xpose.msra.mxu0 0.0
        %521 = vmatprep.subr.mxu0 0.0
        %522 = vmatpush1.xpose.msra.mxu0 0.0
        %523 = vmatprep.subr.mxu0 0.0
        %524 = vmatpush1.xpose.msra.mxu0 0.0
        %525 = vmatprep.subr.mxu0 0.0
        %526 = vmatpush1.xpose.msra.mxu0 0.0
        %527 = vmatprep.subr.mxu0 0.0
        %528 = vmatpush1.xpose.msra.mxu0 0.0
        %529 = vmatprep.mubr.f32.mxu0 0.0
        %530 = vmatmul.mubr.f32.gmra.mrb[0].mxu0 %v462
        %v531 = vpop.f32.mrb[0].mxu0
        %v532 = vadd.f32 %v464, %v531
        %v533 = vpop.f32.mrb[0].mxu0
        %534 = vdwg.mxu0
        %535 = vst [vmem:[%s218] sm:$0x1] %v532
        %s536 = sand.u32 %s138, 1
        %s537 = scalar_lea.sflag [#allocation4], %s536
        %s538 = sand.u32 %s138, 1
        %s539 = scalar_lea.vmem [#allocation3], %s538
        // Predicated region
        $region41: #{tpu_custom_call.1} parent=39 // pred_check
          %p540 = pneg %p148
        $region42: #{tpu_custom_call.1} parent=39 // pred_check_branch
          %542 = sbr.rel (%p540) target = $region44
        $region43: #{tpu_custom_call.1} parent=39 // pred_region
          %s544 = ssub.s32 16, 16
          %545 = vsyncadd %s537, %s544
          %s546 = smul.addr %s20, 16
          %s547 = scalar_lea.hbm %s5, %s546
          %s549 = sshll.u32 %s539, 4
          %s550 = int_to_ptr.vmem [resolvable:$true] %s549
          %552 = dma.vmem_to_hbm [thread:$0]  %s550, 16, %s547, %s537
        $region44: #{tpu_custom_call.1} parent=39 // pred_fallthru
          _
      $region40: #{tpu_custom_call.1} parent=5 // pred_fallthru
        _
      %p553 = scmp.le.s32.totalorder 2, %s15
      // Predicated region
      $region45: #{tpu_custom_call.1} parent=5 // pred_check
        %p554 = pneg %p553
      $region46: #{tpu_custom_call.1} parent=5 // pred_check_branch
        %556 = sbr.rel (%p554) target = $region48
      $region47: #{tpu_custom_call.1} parent=5 // pred_region
        %s557 = ssub.s32 %s15, 2
        // Predicated region
        $region49: #{tpu_custom_call.1} parent=47 // pred_check
          %p558 = pneg %p154
        $region50: #{tpu_custom_call.1} parent=47 // pred_check_branch
          %560 = sbr.rel (%p558) target = $region52
        $region51: #{tpu_custom_call.1} parent=47 // pred_region
          %s561 = sand.u32 %s139, 1
          %s562 = scalar_lea.sflag [#allocation4], %s561
          %s563 = sand.u32 %s139, 1
          %s564 = scalar_lea.vmem [#allocation3], %s563
          %565 = dma.done %s562, 16
        $region52: #{tpu_custom_call.1} parent=47 // pred_fallthru
          _
      $region48: #{tpu_custom_call.1} parent=5 // pred_fallthru
        _
    $region6: #{tpu_custom_call.1} parent=1 // loop_footer
      %s19 = sadd.s32 1, %s15
    $region7: #{tpu_custom_call.1} parent=1 // loop_footer_branch
      %14 = sbr.rel target = $region3
    $region8: #{tpu_custom_call.1} parent=1 // loop_exit
      _
    %566 = vsyncpa [#allocation4], 1
    %s567 = scalar_lea.sflag [#allocation4], 1
    %568 = vsyncpa %s567, 1

</llo_original>
